<compile_context>
chip_gen: v5e
topology: v5e:2x2
jax: 0.10.0
libtpu: 0.0.40
codegen_flags: <defaults>
</compile_context>

<pallas_src>
import functools

import jax
import jax.numpy as jnp
from jax.experimental import pallas as pl
from jax.experimental.pallas import tpu as pltpu


def _round_up(x: int, k: int) -> int:
    return ((x + k - 1) // k) * k


def _vmem_capacity_bytes() -> int:
    """Per-core VMEM capacity; conservative fallback if query is unavailable."""
    try:
        info = pltpu.get_tpu_info()
        cap = getattr(info, "vmem_capacity_bytes", None)
        if cap:
            return int(cap)
    except Exception:
        pass
    return 64 * 1024 * 1024  # conservative: v7x per-TensorCore physical VMEM


def _softmax_rows_kernel(a_ref, o_ref):
    """Numerically stable row-wise (last-dim) softmax of one (TR, M) tile."""
    a = a_ref[...].astype(jnp.float32)               # keep math in f32 (v5e-safe)
    m = jnp.max(a, axis=-1, keepdims=True)
    e = jnp.exp(a - m)
    s = jnp.sum(e, axis=-1, keepdims=True)
    r = pl.reciprocal(s, approx=True)                # EUP vrcp (free slot)
    r = r * (2.0 - s * r)                            # one Newton step -> ~f32 accuracy
    o_ref[...] = (e * r).astype(o_ref.dtype)


def learnable_adjacency_forward(
    A: jax.Array,
    *,
    target_tile_bytes: int = 4 << 20,     # ~4 MiB per tile buffer (2-8 MiB sweet spot)
    single_block_bytes: int = 4 << 20,    # whole-array fast path threshold
) -> jax.Array:
    """softmax(A, axis=-1) via a Pallas kernel (no input padding, no output slicing)."""
    n, m = A.shape
    itemsize = jnp.dtype(A.dtype).itemsize
    sub = max(8, 32 // itemsize)           # native sublane multiple: 8 f32 / 16 bf16 / 32 int8

    cost = pl.CostEstimate(
        flops=5 * n * m,
        transcendentals=n * m + n,
        bytes_accessed=2 * n * m * itemsize,
    )

    # ---- Fast path: whole array as a single full-dim block (always layout-legal).
    # Covers the module's actual config (N=16): no padding, no tiling, no grid.
    if n * m * itemsize <= single_block_bytes or n < 2 * sub:
        return pl.pallas_call(
            _softmax_rows_kernel,
            out_shape=jax.ShapeDtypeStruct((n, m), A.dtype),
            cost_estimate=cost,
        )(A)

    # ---- Tiled path: row tiles, last dim = full m (no column padding/mask needed).
    m_lanes = _round_up(m, 128)            # VMEM lane padding (layout only, not data)
    bytes_per_row = m_lanes * itemsize

    vmem_cap = _vmem_capacity_bytes()
    # 4 resident tile buffers (in + out, each double-buffered) within ~70% of VMEM.
    tile_budget = (7 * vmem_cap // 10) // 4

    tr = min(target_tile_bytes, tile_budget) // bytes_per_row
    tr = max(sub, (tr // sub) * sub)
    # Guarantee >= 2 grid steps so "parallel" can shard rows across v7x's two TCs.
    tr = min(tr, max(sub, ((n // 2) // sub) * sub))

    grid = (pl.cdiv(n, tr),)               # last block OOB rows: reads padded, writes masked
    tile_vmem = tr * bytes_per_row

    return pl.pallas_call(
        _softmax_rows_kernel,
        out_shape=jax.ShapeDtypeStruct((n, m), A.dtype),
        grid_spec=pl.GridSpec(
            grid=grid,
            in_specs=[pl.BlockSpec((tr, m), lambda i: (i, 0))],
            out_specs=pl.BlockSpec((tr, m), lambda i: (i, 0)),
        ),
        compiler_params=pltpu.CompilerParams(
            dimension_semantics=("parallel",),   # rows independent; v7x megacore sharding
            vmem_limit_bytes=max(16 << 20, 4 * tile_vmem + (4 << 20)),
        ),
        cost_estimate=cost,
    )(A)


if __name__ == "__main__":
    num_nodes = 16  # small, consistent with the module's single hyperparameter

    # Deterministic parameter init mirroring nn.Parameter(eye(N) + 0.01*randn(N,N))
    key = jax.random.PRNGKey(0)
    A = (jnp.eye(num_nodes, dtype=jnp.float32)
         + 0.01 * jax.random.normal(key, (num_nodes, num_nodes), dtype=jnp.float32))

    fwd = jax.jit(learnable_adjacency_forward)
    out = jax.block_until_ready(fwd(A))

    ref = jax.nn.softmax(A, axis=-1)
    assert out.shape == (num_nodes, num_nodes)
    assert jnp.allclose(out, ref, atol=1e-5), "mismatch vs reference softmax (fast path)"
    assert jnp.allclose(jnp.sum(out, axis=-1), 1.0, atol=1e-5)

    # Also exercise the row-tiled path on a non-8/128-aligned size with forced
    # small tiles (OOB-masked last block, multi-step grid, no padding anywhere).
    n_big = 300
    A_big = (jnp.eye(n_big, dtype=jnp.float32)
             + 0.01 * jax.random.normal(jax.random.PRNGKey(1),
                                        (n_big, n_big), dtype=jnp.float32))
    fwd_tiled = jax.jit(functools.partial(
        learnable_adjacency_forward,
        single_block_bytes=0, target_tile_bytes=64 * 1024))
    out_big = jax.block_until_ready(fwd_tiled(A_big))
    ref_big = jax.nn.softmax(A_big, axis=-1)
    assert jnp.allclose(out_big, ref_big, atol=1e-5), "mismatch vs reference softmax (tiled path)"

    print("KERNEL_OK")
</pallas_src>

<mosaic_0001>
module attributes {stable_mosaic.version = 11 : i64} {
  func.func @_softmax_rows_kernel(%arg0: memref<16x16xf32, #tpu.memory_space<vmem>>, %arg1: memref<16x16xf32, #tpu.memory_space<vmem>>) attributes {dimension_semantics = [], scalar_prefetch = 0 : i64, scratch_operands = 0 : i64, tpu.core_type = #tpu.core_type<tc>} {
    %c0 = arith.constant 0 : index
    %c0_0 = arith.constant 0 : index
    %0 = vector.load %arg0[%c0, %c0_0] : memref<16x16xf32, #tpu.memory_space<vmem>>, vector<16x16xf32>
    %cst = arith.constant dense<0xFF800000> : vector<16xf32>
    %1 = vector.multi_reduction <maximumf>, %0, %cst [1] : vector<16x16xf32> to vector<16xf32>
    %2 = vector.shape_cast %1 : vector<16xf32> to vector<16x1xf32>
    %3 = vector.broadcast %2 : vector<16x1xf32> to vector<16x16xf32>
    %4 = arith.subf %0, %3 : vector<16x16xf32>
    %5 = math.exp %4 : vector<16x16xf32>
    %cst_1 = arith.constant dense<0.000000e+00> : vector<16xf32>
    %6 = vector.multi_reduction <add>, %5, %cst_1 [1] : vector<16x16xf32> to vector<16xf32>
    %7 = vector.shape_cast %6 : vector<16xf32> to vector<16x1xf32>
    %8 = tpu.reciprocal %7 {approx = true} : vector<16x1xf32> -> vector<16x1xf32>
    %9 = arith.mulf %7, %8 : vector<16x1xf32>
    %cst_2 = arith.constant 2.000000e+00 : f32
    %10 = vector.broadcast %cst_2 : f32 to vector<16x1xf32>
    %11 = arith.subf %10, %9 : vector<16x1xf32>
    %12 = arith.mulf %8, %11 : vector<16x1xf32>
    %13 = vector.broadcast %12 : vector<16x1xf32> to vector<16x16xf32>
    %14 = arith.mulf %5, %13 : vector<16x16xf32>
    %c0_3 = arith.constant 0 : index
    %c0_4 = arith.constant 0 : index
    %15 = vector.load %arg1[%c0_3, %c0_4] : memref<16x16xf32, #tpu.memory_space<vmem>>, vector<16x16xf32>
    tpu.vector_store %arg1[%c0_3, %c0_4], %14 {strides = array<i32>} : memref<16x16xf32, #tpu.memory_space<vmem>>, vector<16x16xf32>,
    return
  }
}

</mosaic_0001>

<llo_original>
// kernel: learnable_adjacency_forward.1
$region0: #{learnable_adjacency_forward.1}
  #allocation0 [shape = 'u32[]', space=smem, size = 0x4, offset = 0x4, fixed_abs, tag = 'smem constant byte address 0x4 - core index']
  #allocation1 [shape = 'u32[72,128]{1,0:T(1,128)}', space=vmem, size = 0x9000, scoped, tag = 'internal scratch']
  %s0 = inlined_call_operand.hbm [shape: f32[16,16], index: 0, kind: input, shape index: {}]
  %s1 = inlined_call_operand.hbm [shape: f32[16,16], index: 1, kind: output, shape index: {}]
  %s2 = sld [smem:[#allocation0]]
  $region18: #{learnable_adjacency_forward.1} parent=0
    _
  %s4 = ssub.s32 1, %s2
  %s5 = scalar_select 0, %s4, %s2
  $region1: #{learnable_adjacency_forward.1} parent=0
    #allocation2 [shape = 'u8[8192]{0}', space=vmem, size = 0x2000, scoped, tag = 'input window, operand 0, single buffered']
    #allocation3 [shape = 's32[1]{0}', space=sflag, size = 0x4, scoped, tag = 'scoped memory for learnable_adjacency_forward.1']
    #allocation4 [shape = 's32[1]{0}', space=sflag, size = 0x4, scoped, tag = 'scoped memory for learnable_adjacency_forward.1']
    #allocation5 [shape = 'u8[8192]{0}', space=vmem, size = 0x2000, scoped, tag = 'output window, operand 0, single buffered']
    %6 = vsyncpa [#allocation3], 0
    %7 = vsyncpa [#allocation4], 0
    // Predicated region
    $region2: #{learnable_adjacency_forward.1} parent=1 // pred_check
      _
    $region3: #{learnable_adjacency_forward.1} parent=1 // pred_check_branch
      %9 = sbr.rel (0) target = $region5
    $region4: #{learnable_adjacency_forward.1} parent=1 // pred_region
      %11 = vsyncadd [#allocation3], 0
      %s12 = sshll.u32 %s0, 4
      %s13 = int_to_ptr.hbm [resolvable:$true] %s12
      %s14 = sshll.u32 [#allocation2], 4
      %s15 = int_to_ptr.vmem [resolvable:$true] %s14
      %20 = dma.hbm_to_vmem [thread:$0]  %s13, 256, %s15, [#allocation3], 128, 128, 8
    $region5: #{learnable_adjacency_forward.1} parent=1 // pred_fallthru
      _
    // Predicated region
    $region6: #{learnable_adjacency_forward.1} parent=1 // pred_check
      _
    $region7: #{learnable_adjacency_forward.1} parent=1 // pred_check_branch
      %22 = sbr.rel (0) target = $region9
    $region8: #{learnable_adjacency_forward.1} parent=1 // pred_region
      %24 = dma.done [#allocation3], 256
    $region9: #{learnable_adjacency_forward.1} parent=1 // pred_fallthru
      _
    %v25 = vld [vmem:[#allocation2] sm:$0xff]
    %v26 = vld [vmem:[#allocation2 + $0x8] sm:$0xff]
    %vm27 = vcmask 130048
    %v28 = vsel %vm27, %v25, -inf
    %29 = vmax.xlane.f32.xlu0 %v28
    %v30 = vpop.xlane.xlu0 %29
    %v31 = vsel %vm27, %v26, -inf
    %32 = vmax.xlane.f32.xlu0 %v31
    %v33 = vpop.xlane.xlu0 %32
    %v34 = vsub.f32 %v25, %v30
    %v35 = vsub.f32 %v26, %v33
    %v36 = vmul.f32 %v34, 1.442695
    %v37 = vpow.pop %v36
    %v38 = vmul.f32 %v35, 1.442695
    %v39 = vpow.pop %v38
    %v40 = vsel %vm27, %v37, 0.0
    %41 = vadd.xlane.f32.xlu0 %v40
    %v42 = vpop.xlane.xlu0 %41
    %v43 = vsel %vm27, %v39, 0.0
    %44 = vadd.xlane.f32.xlu0 %v43
    %v45 = vpop.xlane.xlu0 %44
    %v46 = vrcp.pop %v42
    %v47 = vrcp.pop %v45
    %v48 = vmul.f32 %v42, %v46
    %v49 = vmul.f32 %v45, %v47
    %v50 = vsub.f32 2.0, %v48
    %v51 = vsub.f32 2.0, %v49
    %v52 = vmul.f32 %v46, %v50
    %v53 = vmul.f32 %v47, %v51
    %v54 = vmul.f32 %v37, %v52
    %v55 = vmul.f32 %v39, %v53
    %56 = vst.msk [vmem:[#allocation5] sm:$0xff] %vm27, %v54
    %57 = vst.msk [vmem:[#allocation5 + $0x8] sm:$0xff] %vm27, %v55
    // Predicated region
    $region10: #{learnable_adjacency_forward.1} parent=1 // pred_check
      _
    $region11: #{learnable_adjacency_forward.1} parent=1 // pred_check_branch
      %59 = sbr.rel (0) target = $region13
    $region12: #{learnable_adjacency_forward.1} parent=1 // pred_region
      %61 = vsyncadd [#allocation4], 0
      %s62 = sshll.u32 [#allocation5], 4
      %s63 = int_to_ptr.vmem [resolvable:$true] %s62
      %s64 = sshll.u32 %s1, 4
      %s65 = int_to_ptr.hbm [resolvable:$true] %s64
      %70 = dma.vmem_to_hbm [thread:$0]  %s63, 256, %s65, [#allocation4], 128, 128, 8
    $region13: #{learnable_adjacency_forward.1} parent=1 // pred_fallthru
      _
    // Predicated region
    $region14: #{learnable_adjacency_forward.1} parent=1 // pred_check
      _
    $region15: #{learnable_adjacency_forward.1} parent=1 // pred_check_branch
      %72 = sbr.rel (0) target = $region17
    $region16: #{learnable_adjacency_forward.1} parent=1 // pred_region
      %74 = dma.done [#allocation4], 256
    $region17: #{learnable_adjacency_forward.1} parent=1 // pred_fallthru
      _
    %75 = vsyncpa [#allocation3], 1
    %76 = vsyncpa [#allocation4], 1

</llo_original>
